<compile_context>
chip_gen: v7x
topology: tpu7x:2x2x1
jax: 0.10.0
libtpu: 0.0.40
codegen_flags: <defaults>
</compile_context>

<pallas_src>
import functools

import jax
import jax.numpy as jnp
from jax.experimental import pallas as pl
from jax.experimental.pallas import tpu as pltpu


def _round_up(v, m):
    return (v + m - 1) // m * m


def _pick_tq(n, cap=256):
    """Largest multiple-of-8 divisor of n (capped); fall back to n (one tile)."""
    for t in range(min(n, cap), 7, -1):
        if n % t == 0 and t % 8 == 0:
            return t
    return n


def _pick_vmem_limit():
    """Chip-aware scoped-VMEM limit: 3/4 of physical VMEM, capped at 100 MiB.

    v5e/v6e (128 MiB physical) -> ~96-100 MiB; v7x (64 MiB) -> 48 MiB, leaving
    Mosaic internal-scratch headroom.  Falls back to the compiler default."""
    try:
        cap = pltpu.get_tpu_info().vmem_capacity_bytes
        return int(min(cap * 3 // 4, 100 * 1024 * 1024))
    except Exception:
        return None


def _attention_kernel(x_ref, wq_ref, wk_ref, wv_ref, wproj_ref, bias_ref,
                      o_ref, kbuf, vbuf, acc_ref, *, tq, exp_in_bf16):
    """Grid = (B, H, N // tq): batch outer ("parallel"), heads middle
    (reduction into the f32 accumulator), query-row tiles innermost.

    Per grid step (b, h, qi):
      * if qi == 0: compute this head's k/v once into VMEM scratch.
      * q tile -> scores -> online-stable softmax -> p @ v -> accumulate this
        head's slice of the output projection into acc rows [qi*tq, (qi+1)*tq).
      * at the last head, add the bias and store the lane-dense output rows.
    """
    h = pl.program_id(1)
    qi = pl.program_id(2)
    num_heads = pl.num_programs(1)

    dt = x_ref.dtype

    @pl.when(jnp.logical_and(h == 0, qi == 0))
    def _init_acc():
        acc_ref[...] = jnp.zeros_like(acc_ref)

    x_full = x_ref[0]                                             # (N, C)

    @pl.when(qi == 0)
    def _compute_kv():
        # Per-head k/v projections: computed once per (b, h), cached in VMEM,
        # reused by every query tile.
        k = jnp.dot(x_full, wk_ref[h], preferred_element_type=jnp.float32)
        v = jnp.dot(x_full, wv_ref[h], preferred_element_type=jnp.float32)
        kbuf[...] = k.astype(dt)
        vbuf[...] = v.astype(dt)

    row0 = pl.multiple_of(qi * tq, tq)
    x_q = x_ref[0, pl.ds(row0, tq), :]                            # (tq, C)

    # q projection (softmax scale already folded into Wq by the wrapper).
    q = jnp.dot(x_q, wq_ref[h], preferred_element_type=jnp.float32)   # (tq, hd)

    # Scores (tq, N): contract over head_dim, f32 accumulation on the MXU.
    s = jax.lax.dot_general(q.astype(dt), kbuf[...],
                            (((1,), (1,)), ((), ())),
                            preferred_element_type=jnp.float32)

    # Numerically-stable softmax.  exp in bf16 for bf16 inputs (EUP relief on
    # v6e/v7x); normalization is applied after p @ v so the reciprocal scales a
    # (tq, hd) tile instead of (tq, N).
    s = s - jnp.max(s, axis=-1, keepdims=True)
    if exp_in_bf16:
        p = jnp.exp(s.astype(jnp.bfloat16))
    else:
        p = jnp.exp(s)
    denom = jnp.sum(p.astype(jnp.float32), axis=-1, keepdims=True)
    inv_denom = pl.reciprocal(denom, approx=True)
    # attn_drop(p) with p_drop = 0.0 -> identity.

    head_out = jnp.dot(p.astype(dt), vbuf[...],
                       preferred_element_type=jnp.float32)        # (tq, hd)
    head_out = head_out * inv_denom

    # This head's slice of the output projection, summed over heads
    # (proj(concat_h o_h) == sum_h o_h @ Wp_h -> no concat).
    acc_ref[pl.ds(row0, tq), :] += jnp.dot(
        head_out.astype(dt), wproj_ref[h], preferred_element_type=jnp.float32)

    @pl.when(h == num_heads - 1)
    def _finalize():
        out = acc_ref[pl.ds(row0, tq), :] + bias_ref[...]
        # proj_drop(out) with p_drop = 0.0 -> identity.
        o_ref[0, pl.ds(row0, tq), :] = out.astype(o_ref.dtype)


def prepare_attention_params(w_qkv, w_proj, b_proj, *, num_heads, dtype):
    """One-time weight repacking -- call at parameter-load time, NOT per forward.

    w_qkv : (3C, C)  torch nn.Linear(dim, 3*dim, bias=False).weight
    w_proj: (C, C)   torch nn.Linear(dim, dim).weight
    b_proj: (C,)     torch nn.Linear(dim, dim).bias
    """
    three_c, C = w_qkv.shape
    assert three_c == 3 * C
    H = num_heads
    assert C % H == 0, "dim must be divisible by num_heads"
    hd = C // H
    scale = hd ** (-0.5)
    c_out_pad = _round_up(C, 128)

    # Per-head input-projection weights, (H, C, hd); softmax scale folded into q.
    wq = jnp.transpose(w_qkv[0 * C:1 * C].reshape(H, hd, C), (0, 2, 1)) * scale
    wk = jnp.transpose(w_qkv[1 * C:2 * C].reshape(H, hd, C), (0, 2, 1))
    wv = jnp.transpose(w_qkv[2 * C:3 * C].reshape(H, hd, C), (0, 2, 1))

    # Per-head output-projection slices, (H, hd, c_out_pad); padded cols are
    # zero so they contribute nothing (output is sliced back to C).
    wp = jnp.transpose(w_proj).reshape(H, hd, C)
    wp = jnp.pad(wp, ((0, 0), (0, 0), (0, c_out_pad - C)))

    bias = jnp.pad(b_proj.astype(jnp.float32),
                   (0, c_out_pad - C)).reshape(1, c_out_pad)      # kept f32

    return dict(
        wq=wq.astype(dtype), wk=wk.astype(dtype), wv=wv.astype(dtype),
        wproj=wp.astype(dtype), bias=bias,
        num_heads=H, head_dim=hd, dim=C, c_out_pad=c_out_pad,
    )


def attention_pallas(x, params, *, tq=None):
    """x: (B, N, C) float32 or bfloat16; params from prepare_attention_params."""
    B, N, C = x.shape
    assert C == params["dim"]
    H = params["num_heads"]
    hd = params["head_dim"]
    c_out_pad = params["c_out_pad"]
    dt = x.dtype

    if tq is None:
        tq = _pick_tq(N)
    assert N % tq == 0, f"tq={tq} must divide N={N}"

    wq = params["wq"].astype(dt)
    wk = params["wk"].astype(dt)
    wv = params["wv"].astype(dt)
    wproj = params["wproj"].astype(dt)
    bias = params["bias"]                 # stays f32

    kernel = functools.partial(_attention_kernel, tq=tq,
                               exp_in_bf16=(dt == jnp.bfloat16))

    cp_kwargs = dict(dimension_semantics=("parallel", "arbitrary", "arbitrary"))
    vmem_limit = _pick_vmem_limit()
    if vmem_limit is not None:
        cp_kwargs["vmem_limit_bytes"] = vmem_limit

    out_pad = pl.pallas_call(
        kernel,
        out_shape=jax.ShapeDtypeStruct((B, N, c_out_pad), dt),
        grid_spec=pltpu.PrefetchScalarGridSpec(
            num_scalar_prefetch=0,
            grid=(B, H, N // tq),        # heads = reduction (middle), rows inner
            in_specs=[
                # full sequence of this batch element; block index only depends
                # on b -> DMA'd once per batch element.
                pl.BlockSpec((1, N, C), lambda b, h, qi: (b, 0, 0)),
                # all per-head weights resident for the whole kernel
                # (constant block index -> single DMA), indexed by h in-kernel.
                pl.BlockSpec((H, C, hd), lambda b, h, qi: (0, 0, 0)),
                pl.BlockSpec((H, C, hd), lambda b, h, qi: (0, 0, 0)),
                pl.BlockSpec((H, C, hd), lambda b, h, qi: (0, 0, 0)),
                pl.BlockSpec((H, hd, c_out_pad), lambda b, h, qi: (0, 0, 0)),
                pl.BlockSpec((1, c_out_pad), lambda b, h, qi: (0, 0)),
            ],
            # lane-dense output block (last dim multiple of 128), resident per
            # batch element -> written to HBM once per batch element.
            out_specs=pl.BlockSpec((1, N, c_out_pad), lambda b, h, qi: (b, 0, 0)),
            scratch_shapes=[
                pltpu.VMEM((N, hd), dt),                  # k cache (per b, h)
                pltpu.VMEM((N, hd), dt),                  # v cache (per b, h)
                pltpu.VMEM((N, c_out_pad), jnp.float32),  # head-sum accumulator
            ],
        ),
        compiler_params=pltpu.CompilerParams(**cp_kwargs),
    )(x, wq, wk, wv, wproj, bias)

    return out_pad[:, :, :C]


def attention_reference(x, w_qkv, w_proj, b_proj, *, num_heads):
    """Pure-JAX reference replicating the PyTorch forward (float32)."""
    B, N, C = x.shape
    hd = C // num_heads
    scale = hd ** (-0.5)
    qkv = x @ w_qkv.T                                       # (B, N, 3C)
    qkv = qkv.reshape(B, N, 3, num_heads, hd)
    qkv = jnp.transpose(qkv, (2, 0, 3, 1, 4))               # (3, B, H, N, hd)
    q, k, v = qkv[0], qkv[1], qkv[2]
    attn = jnp.einsum('bhnd,bhmd->bhnm', q, k) * scale
    attn = jax.nn.softmax(attn, axis=-1)
    out = jnp.einsum('bhnm,bhmd->bhnd', attn, v)            # (B, H, N, hd)
    out = jnp.transpose(out, (0, 2, 1, 3)).reshape(B, N, C)
    return out @ w_proj.T + b_proj


if __name__ == "__main__":
    # Small shapes consistent with the module: dim divisible by num_heads=5.
    B, N, C = 2, 8, 40
    num_heads = 5

    key = jax.random.PRNGKey(0)
    kx, kqkv, kproj, kb, kx2 = jax.random.split(key, 5)

    x = jax.random.normal(kx, (B, N, C), dtype=jnp.float32)
    # torch.nn.Linear layout: (out_features, in_features).
    w_qkv = jax.random.normal(kqkv, (3 * C, C), dtype=jnp.float32) / jnp.sqrt(C)
    w_proj = jax.random.normal(kproj, (C, C), dtype=jnp.float32) / jnp.sqrt(C)
    b_proj = jax.random.normal(kb, (C,), dtype=jnp.float32) * 0.01

    # One-time weight repacking (parameter-load-time, not per call).
    params_f32 = prepare_attention_params(w_qkv, w_proj, b_proj,
                                          num_heads=num_heads, dtype=jnp.float32)
    params_bf16 = prepare_attention_params(w_qkv, w_proj, b_proj,
                                           num_heads=num_heads, dtype=jnp.bfloat16)

    # --- float32 path (tolerance allows the EUP approximate reciprocal) ------
    ref = attention_reference(x, w_qkv, w_proj, b_proj, num_heads=num_heads)
    out = jax.block_until_ready(attention_pallas(x, params_f32))
    assert out.shape == (B, N, C)
    max_err = float(jnp.max(jnp.abs(out - ref)))
    assert jnp.allclose(out, ref, atol=5e-3, rtol=5e-3), \
        f"f32 max abs err {max_err}"

    # --- bfloat16 path (reduced-precision MXU operands, bf16 exp) ------------
    out_bf16 = jax.block_until_ready(
        attention_pallas(x.astype(jnp.bfloat16), params_bf16))
    max_err_bf16 = float(jnp.max(jnp.abs(out_bf16.astype(jnp.float32) - ref)))
    assert max_err_bf16 < 0.25, f"bf16 max abs err {max_err_bf16}"

    # --- multi-query-tile path: exercises k/v caching across qi tiles --------
    N2 = 64
    x2 = jax.random.normal(kx2, (B, N2, C), dtype=jnp.float32)
    ref2 = attention_reference(x2, w_qkv, w_proj, b_proj, num_heads=num_heads)
    out2 = jax.block_until_ready(attention_pallas(x2, params_f32, tq=16))
    max_err2 = float(jnp.max(jnp.abs(out2 - ref2)))
    assert jnp.allclose(out2, ref2, atol=1e-2, rtol=1e-2), \
        f"f32 (tiled) max abs err {max_err2}"

    print("KERNEL_OK")
</pallas_src>

<mosaic_0001>
module attributes {stable_mosaic.version = 11 : i64} {
  func.func @_attention_kernel(%arg0: i32, %arg1: i32, %arg2: i32, %arg3: memref<1x8x40xf32, #tpu.memory_space<vmem>>, %arg4: memref<5x40x8xf32, #tpu.memory_space<vmem>>, %arg5: memref<5x40x8xf32, #tpu.memory_space<vmem>>, %arg6: memref<5x40x8xf32, #tpu.memory_space<vmem>>, %arg7: memref<5x8x128xf32, #tpu.memory_space<vmem>>, %arg8: memref<1x128xf32, #tpu.memory_space<vmem>>, %arg9: memref<1x8x128xf32, #tpu.memory_space<vmem>>, %arg10: memref<8x8xf32, #tpu.memory_space<vmem>>, %arg11: memref<8x8xf32, #tpu.memory_space<vmem>>, %arg12: memref<8x128xf32, #tpu.memory_space<vmem>>) attributes {dimension_semantics = [#tpu.dimension_semantics<parallel>, #tpu.dimension_semantics<arbitrary>, #tpu.dimension_semantics<arbitrary>], iteration_bounds = array<i64: 2, 5, 1>, scalar_prefetch = 0 : i64, scratch_operands = 3 : i64, tpu.core_type = #tpu.core_type<tc>, window_params = [{transform_indices = @transform_0, window_bounds = array<i64: 1, 8, 40>}, {pipeline_mode = #tpu.pipeline_mode<synchronous>, transform_indices = @transform_1, window_bounds = array<i64: 5, 40, 8>}, {pipeline_mode = #tpu.pipeline_mode<synchronous>, transform_indices = @transform_2, window_bounds = array<i64: 5, 40, 8>}, {pipeline_mode = #tpu.pipeline_mode<synchronous>, transform_indices = @transform_3, window_bounds = array<i64: 5, 40, 8>}, {pipeline_mode = #tpu.pipeline_mode<synchronous>, transform_indices = @transform_4, window_bounds = array<i64: 5, 8, 128>}, {pipeline_mode = #tpu.pipeline_mode<synchronous>, transform_indices = @transform_5, window_bounds = array<i64: 1, 128>}, {transform_indices = @transform_6, window_bounds = array<i64: 1, 8, 128>}]} {
    %c0_i32 = arith.constant 0 : i32
    %0 = arith.cmpi eq, %arg1, %c0_i32 : i32
    %c0_i32_0 = arith.constant 0 : i32
    %1 = arith.cmpi eq, %arg2, %c0_i32_0 : i32
    %2 = arith.andi %0, %1 : i1
    %3 = arith.extui %2 : i1 to i32
    %c0_i32_1 = arith.constant 0 : i32
    %4 = arith.cmpi ne, %3, %c0_i32_1 : i32
    scf.if %4 {
      %cst_24 = arith.constant 0.000000e+00 : f32
      %45 = vector.broadcast %cst_24 : f32 to vector<8x128xf32>
      %c0_25 = arith.constant 0 : index
      %c0_26 = arith.constant 0 : index
      %46 = vector.load %arg12[%c0_25, %c0_26] : memref<8x128xf32, #tpu.memory_space<vmem>>, vector<8x128xf32>
      tpu.vector_store %arg12[%c0_25, %c0_26], %45 {strides = array<i32>} : memref<8x128xf32, #tpu.memory_space<vmem>>, vector<8x128xf32>,
    } else {
    }
    %c0 = arith.constant 0 : index
    %c0_2 = arith.constant 0 : index
    %c0_3 = arith.constant 0 : index
    %5 = vector.load %arg3[%c0, %c0_2, %c0_3] : memref<1x8x40xf32, #tpu.memory_space<vmem>>, vector<1x8x40xf32>
    %6 = vector.shape_cast %5 : vector<1x8x40xf32> to vector<8x40xf32>
    %c0_i32_4 = arith.constant 0 : i32
    %7 = arith.cmpi eq, %arg2, %c0_i32_4 : i32
    %8 = arith.extui %7 : i1 to i32
    %c0_i32_5 = arith.constant 0 : i32
    %9 = arith.cmpi ne, %8, %c0_i32_5 : i32
    scf.if %9 {
      %45 = arith.index_cast %arg1 : i32 to index
      %c0_24 = arith.constant 0 : index
      %c0_25 = arith.constant 0 : index
      %46 = vector.load %arg5[%45, %c0_24, %c0_25] : memref<5x40x8xf32, #tpu.memory_space<vmem>>, vector<1x40x8xf32>
      %47 = vector.shape_cast %46 : vector<1x40x8xf32> to vector<40x8xf32>
      %cst_26 = arith.constant dense<0.000000e+00> : vector<8x8xf32>
      %48 = tpu.matmul %6, %47, %cst_26 {dimension_numbers = #tpu.dot_dimension_numbers<[1], [0], [0], [1], [0, 0, 1, 1], [], []>} : vector<8x40xf32>, vector<40x8xf32>, vector<8x8xf32> -> vector<8x8xf32>
      %49 = arith.index_cast %arg1 : i32 to index
      %c0_27 = arith.constant 0 : index
      %c0_28 = arith.constant 0 : index
      %50 = vector.load %arg6[%49, %c0_27, %c0_28] : memref<5x40x8xf32, #tpu.memory_space<vmem>>, vector<1x40x8xf32>
      %51 = vector.shape_cast %50 : vector<1x40x8xf32> to vector<40x8xf32>
      %cst_29 = arith.constant dense<0.000000e+00> : vector<8x8xf32>
      %52 = tpu.matmul %6, %51, %cst_29 {dimension_numbers = #tpu.dot_dimension_numbers<[1], [0], [0], [1], [0, 0, 1, 1], [], []>} : vector<8x40xf32>, vector<40x8xf32>, vector<8x8xf32> -> vector<8x8xf32>
      %c0_30 = arith.constant 0 : index
      %c0_31 = arith.constant 0 : index
      %53 = vector.load %arg10[%c0_30, %c0_31] : memref<8x8xf32, #tpu.memory_space<vmem>>, vector<8x8xf32>
      tpu.vector_store %arg10[%c0_30, %c0_31], %48 {strides = array<i32>} : memref<8x8xf32, #tpu.memory_space<vmem>>, vector<8x8xf32>,
      %c0_32 = arith.constant 0 : index
      %c0_33 = arith.constant 0 : index
      %54 = vector.load %arg11[%c0_32, %c0_33] : memref<8x8xf32, #tpu.memory_space<vmem>>, vector<8x8xf32>
      tpu.vector_store %arg11[%c0_32, %c0_33], %52 {strides = array<i32>} : memref<8x8xf32, #tpu.memory_space<vmem>>, vector<8x8xf32>,
    } else {
    }
    %c8_i32 = arith.constant 8 : i32
    %10 = arith.muli %arg2, %c8_i32 : i32
    %11 = tpu.assume_multiple %10, 8 : i32
    %c0_6 = arith.constant 0 : index
    %12 = arith.index_cast %11 : i32 to index
    %c0_7 = arith.constant 0 : index
    %13 = vector.load %arg3[%c0_6, %12, %c0_7] : memref<1x8x40xf32, #tpu.memory_space<vmem>>, vector<1x8x40xf32>
    %14 = vector.shape_cast %13 : vector<1x8x40xf32> to vector<8x40xf32>
    %15 = arith.index_cast %arg1 : i32 to index
    %c0_8 = arith.constant 0 : index
    %c0_9 = arith.constant 0 : index
    %16 = vector.load %arg4[%15, %c0_8, %c0_9] : memref<5x40x8xf32, #tpu.memory_space<vmem>>, vector<1x40x8xf32>
    %17 = vector.shape_cast %16 : vector<1x40x8xf32> to vector<40x8xf32>
    %cst = arith.constant dense<0.000000e+00> : vector<8x8xf32>
    %18 = tpu.matmul %14, %17, %cst {dimension_numbers = #tpu.dot_dimension_numbers<[1], [0], [0], [1], [0, 0, 1, 1], [], []>} : vector<8x40xf32>, vector<40x8xf32>, vector<8x8xf32> -> vector<8x8xf32>
    %c0_10 = arith.constant 0 : index
    %c0_11 = arith.constant 0 : index
    %19 = vector.load %arg10[%c0_10, %c0_11] : memref<8x8xf32, #tpu.memory_space<vmem>>, vector<8x8xf32>
    %cst_12 = arith.constant dense<0.000000e+00> : vector<8x8xf32>
    %20 = tpu.matmul %18, %19, %cst_12 {dimension_numbers = #tpu.dot_dimension_numbers<[1], [1], [0], [0], [0, 0, 1, 0], [], []>} : vector<8x8xf32>, vector<8x8xf32>, vector<8x8xf32> -> vector<8x8xf32>
    %cst_13 = arith.constant dense<0xFF800000> : vector<8xf32>
    %21 = vector.multi_reduction <maximumf>, %20, %cst_13 [1] : vector<8x8xf32> to vector<8xf32>
    %22 = vector.shape_cast %21 : vector<8xf32> to vector<8x1xf32>
    %23 = vector.broadcast %22 : vector<8x1xf32> to vector<8x8xf32>
    %24 = arith.subf %20, %23 : vector<8x8xf32>
    %25 = math.exp %24 : vector<8x8xf32>
    %cst_14 = arith.constant dense<0.000000e+00> : vector<8xf32>
    %26 = vector.multi_reduction <add>, %25, %cst_14 [1] : vector<8x8xf32> to vector<8xf32>
    %27 = vector.shape_cast %26 : vector<8xf32> to vector<8x1xf32>
    %28 = tpu.reciprocal %27 {approx = true} : vector<8x1xf32> -> vector<8x1xf32>
    %c0_15 = arith.constant 0 : index
    %c0_16 = arith.constant 0 : index
    %29 = vector.load %arg11[%c0_15, %c0_16] : memref<8x8xf32, #tpu.memory_space<vmem>>, vector<8x8xf32>
    %cst_17 = arith.constant dense<0.000000e+00> : vector<8x8xf32>
    %30 = tpu.matmul %25, %29, %cst_17 {dimension_numbers = #tpu.dot_dimension_numbers<[1], [0], [0], [1], [0, 0, 1, 1], [], []>} : vector<8x8xf32>, vector<8x8xf32>, vector<8x8xf32> -> vector<8x8xf32>
    %31 = vector.broadcast %28 : vector<8x1xf32> to vector<8x8xf32>
    %32 = arith.mulf %30, %31 : vector<8x8xf32>
    %33 = arith.index_cast %11 : i32 to index
    %c0_18 = arith.constant 0 : index
    %34 = vector.load %arg12[%33, %c0_18] : memref<8x128xf32, #tpu.memory_space<vmem>>, vector<8x128xf32>
    %35 = arith.index_cast %arg1 : i32 to index
    %c0_19 = arith.constant 0 : index
    %c0_20 = arith.constant 0 : index
    %36 = vector.load %arg7[%35, %c0_19, %c0_20] : memref<5x8x128xf32, #tpu.memory_space<vmem>>, vector<1x8x128xf32>
    %37 = vector.shape_cast %36 : vector<1x8x128xf32> to vector<8x128xf32>
    %cst_21 = arith.constant dense<0.000000e+00> : vector<8x128xf32>
    %38 = tpu.matmul %32, %37, %cst_21 {dimension_numbers = #tpu.dot_dimension_numbers<[1], [0], [0], [1], [0, 0, 1, 1], [], []>} : vector<8x8xf32>, vector<8x128xf32>, vector<8x128xf32> -> vector<8x128xf32>
    %39 = arith.addf %34, %38 : vector<8x128xf32>
    %40 = arith.index_cast %11 : i32 to index
    %c0_22 = arith.constant 0 : index
    %41 = vector.load %arg12[%40, %c0_22] : memref<8x128xf32, #tpu.memory_space<vmem>>, vector<8x128xf32>
    tpu.vector_store %arg12[%40, %c0_22], %39 {strides = array<i32>} : memref<8x128xf32, #tpu.memory_space<vmem>>, vector<8x128xf32>,
    %c4_i32 = arith.constant 4 : i32
    %42 = arith.cmpi eq, %arg1, %c4_i32 : i32
    %43 = arith.extui %42 : i1 to i32
    %c0_i32_23 = arith.constant 0 : i32
    %44 = arith.cmpi ne, %43, %c0_i32_23 : i32
    scf.if %44 {
      %45 = arith.index_cast %11 : i32 to index
      %c0_24 = arith.constant 0 : index
      %46 = vector.load %arg12[%45, %c0_24] : memref<8x128xf32, #tpu.memory_space<vmem>>, vector<8x128xf32>
      %c0_25 = arith.constant 0 : index
      %c0_26 = arith.constant 0 : index
      %47 = vector.load %arg8[%c0_25, %c0_26] : memref<1x128xf32, #tpu.memory_space<vmem>>, vector<1x128xf32>
      %48 = vector.broadcast %47 : vector<1x128xf32> to vector<8x128xf32>
      %49 = arith.addf %46, %48 : vector<8x128xf32>
      %c0_27 = arith.constant 0 : index
      %50 = arith.index_cast %11 : i32 to index
      %c0_28 = arith.constant 0 : index
      %51 = vector.load %arg9[%c0_27, %50, %c0_28] : memref<1x8x128xf32, #tpu.memory_space<vmem>>, vector<1x8x128xf32>
      %52 = vector.shape_cast %51 : vector<1x8x128xf32> to vector<8x128xf32>
      %53 = vector.shape_cast %49 : vector<8x128xf32> to vector<1x8x128xf32>
      tpu.vector_store %arg9[%c0_27, %50, %c0_28], %53 {strides = array<i32>} : memref<1x8x128xf32, #tpu.memory_space<vmem>>, vector<1x8x128xf32>,
    } else {
    }
    return
  }
  func.func @transform_0(%arg0: i32, %arg1: i32, %arg2: i32) -> (i32, i32, i32) {
    %c0_i32 = arith.constant 0 : i32
    %c0_i32_0 = arith.constant 0 : i32
    %c0_i32_1 = arith.constant 0 : i32
    return %arg0, %c0_i32, %c0_i32_0 : i32, i32, i32
  }
  func.func @transform_1(%arg0: i32, %arg1: i32, %arg2: i32) -> (i32, i32, i32) {
    %c0_i32 = arith.constant 0 : i32
    %c0_i32_0 = arith.constant 0 : i32
    %c0_i32_1 = arith.constant 0 : i32
    %c0_i32_2 = arith.constant 0 : i32
    return %c0_i32, %c0_i32_0, %c0_i32_1 : i32, i32, i32
  }
  func.func @transform_2(%arg0: i32, %arg1: i32, %arg2: i32) -> (i32, i32, i32) {
    %c0_i32 = arith.constant 0 : i32
    %c0_i32_0 = arith.constant 0 : i32
    %c0_i32_1 = arith.constant 0 : i32
    %c0_i32_2 = arith.constant 0 : i32
    return %c0_i32, %c0_i32_0, %c0_i32_1 : i32, i32, i32
  }
  func.func @transform_3(%arg0: i32, %arg1: i32, %arg2: i32) -> (i32, i32, i32) {
    %c0_i32 = arith.constant 0 : i32
    %c0_i32_0 = arith.constant 0 : i32
    %c0_i32_1 = arith.constant 0 : i32
    %c0_i32_2 = arith.constant 0 : i32
    return %c0_i32, %c0_i32_0, %c0_i32_1 : i32, i32, i32
  }
  func.func @transform_4(%arg0: i32, %arg1: i32, %arg2: i32) -> (i32, i32, i32) {
    %c0_i32 = arith.constant 0 : i32
    %c0_i32_0 = arith.constant 0 : i32
    %c0_i32_1 = arith.constant 0 : i32
    %c0_i32_2 = arith.constant 0 : i32
    return %c0_i32, %c0_i32_0, %c0_i32_1 : i32, i32, i32
  }
  func.func @transform_5(%arg0: i32, %arg1: i32, %arg2: i32) -> (i32, i32) {
    %c0_i32 = arith.constant 0 : i32
    %c0_i32_0 = arith.constant 0 : i32
    %c0_i32_1 = arith.constant 0 : i32
    return %c0_i32, %c0_i32_0 : i32, i32
  }
  func.func @transform_6(%arg0: i32, %arg1: i32, %arg2: i32) -> (i32, i32, i32) {
    %c0_i32 = arith.constant 0 : i32
    %c0_i32_0 = arith.constant 0 : i32
    %c0_i32_1 = arith.constant 0 : i32
    return %arg0, %c0_i32, %c0_i32_0 : i32, i32, i32
  }
}

</mosaic_0001>

<llo_original>
// kernel: tpu_custom_call.1
$region0: #{tpu_custom_call.1}
  #allocation0 [shape = 'u32[]', space=smem, size = 0x4, offset = 0x4, fixed_abs, tag = 'smem constant byte address 0x4 - core index']
  #allocation1 [shape = 'u32[144,128]{1,0:T(1,128)}', space=vmem, size = 0x12000, scoped, tag = 'internal scratch']
  #allocation2 [shape = 'f32[8,8]{1,0:T(8,128)}', space=vmem, size = 0x1000, scoped, tag = 'scratch operand']
  #allocation3 [shape = 'f32[8,8]{1,0:T(8,128)}', space=vmem, size = 0x1000, scoped, tag = 'scratch operand']
  #allocation4 [shape = 'f32[8,128]{1,0:T(8,128)}', space=vmem, size = 0x1000, scoped, tag = 'scratch operand']
  %s0 = inlined_call_operand.vmem [shape: f32[2,8,40], index: 0, kind: input, shape index: {}]
  %s1 = inlined_call_operand.vmem [shape: f32[5,40,8], index: 1, kind: input, shape index: {}]
  %s2 = inlined_call_operand.vmem [shape: f32[5,40,8], index: 2, kind: input, shape index: {}]
  %s3 = inlined_call_operand.vmem [shape: f32[5,40,8], index: 3, kind: input, shape index: {}]
  %s4 = inlined_call_operand.vmem [shape: f32[5,8,128], index: 4, kind: input, shape index: {}]
  %s5 = inlined_call_operand.vmem [shape: f32[1,128], index: 5, kind: input, shape index: {}]
  %s6 = inlined_call_operand.hbm [shape: f32[2,8,128], index: 6, kind: output, shape index: {}]
  %s7 = sld [smem:[#allocation0]]
  $region69: #{tpu_custom_call.1} parent=0
    _
  %s9 = ssub.s32 1, %s7
  %s10 = scalar_select 0, %s9, %s7
  $region1: #{tpu_custom_call.1} parent=0
    #allocation5 [shape = 'u8[8192]{0}', space=vmem, size = 0x2000, scoped, tag = 'output window, operand 0']
    #allocation6 [shape = 's32[2]{0}', space=sflag, size = 0x8, scoped, tag = 'scoped memory for tpu_custom_call.1']
    %11 = vsyncpa [#allocation6], 0
    %s12 = scalar_lea.sflag [#allocation6], 1
    %13 = vsyncpa %s12, 0
    loop: start=0, step=1, limit=12
    $region2: #{tpu_custom_call.1} parent=1 // loop_pre_header
      _
    $region3: #{tpu_custom_call.1} parent=1 // loop_header
      %s15 = sphi 0, %s19
      %p16 = scmp.ge.s32.totalorder %s15, 12
      %s22 = sphi 0, %s41
      %s23 = sphi 0, %s37
      %s24 = sphi 0, %s33
      %s25 = sphi 0, %s22
      %s26 = sphi 0, %s23
      %s27 = sphi 0, %s24
      %s28 = sphi 0, %s25
      %s29 = sphi 0, %s26
      %s30 = sphi 0, %s27
      %s44 = sphi 0, %s46
      %s47 = sphi 0, %s44
      %s48 = sphi 0, %s47
      %s64 = sphi 0, %s48
      %s68 = sphi 0, %s68
      %s70 = sphi 0, %s68
      %s71 = sphi 0, %s70
      %s85 = sphi 0, %s71
      %s89 = sphi 0, %s89
      %s91 = sphi 0, %s89
      %s92 = sphi 0, %s91
      %s106 = sphi 0, %s92
      %s110 = sphi 0, %s110
      %s112 = sphi 0, %s110
      %s113 = sphi 0, %s112
      %s127 = sphi 0, %s113
      %s131 = sphi 0, %s131
      %s133 = sphi 0, %s131
      %s134 = sphi 0, %s133
      %s148 = sphi 0, %s134
      %s152 = sphi 0, %s152
      %s154 = sphi 0, %s152
      %s155 = sphi 0, %s154
      %s169 = sphi 0, %s155
      %s175 = sphi 0, %s177
      %s178 = sphi 0, %s175
      %s179 = sphi 0, %s178
      %s195 = sphi 0, %s179
    $region4: #{tpu_custom_call.1} parent=1 // loop_header_branch
      %18 = sbr.rel (%p16) target = $region8
    $region5: #{tpu_custom_call.1} parent=1 // loop_body
      %s20 = ssub.s32 %s15, 1
      %s21 = ssub.s32 %s15, 2
      %s31 = sadd.s32 1, %s24
      %p32 = scmp.ge.s32.totalorder %s31, 1
      %s33 = scalar_select %p32, 0, %s31
      %s34 = sadd.s32 1, %s23
      %s35 = scalar_select %p32, %s34, %s23
      %p36 = scmp.ge.s32.totalorder %s35, 5
      %s37 = scalar_select %p36, 0, %s35
      %s38 = sadd.s32 1, %s22
      %s39 = scalar_select %p36, %s38, %s22
      %p40 = scmp.ge.s32.totalorder %s39, 2
      %s41 = scalar_select %p40, 0, %s39
      %s42 = ssub.s32 %s22, %s41
      %p43 = scmp.eq.s32.totalorder %s42, 0
      %s45 = sadd.s32 %s44, 1
      %s46 = scalar_select %p43, %s44, %s45
      %p49 = pneg %p43
      %p50 = scmp.eq.s32.totalorder %s15, 9
      %p51 = por %p49, %p50
      %p52 = scmp.ne.s32.totalorder %s44, %s47
      %p53 = scmp.eq.s32.totalorder %s15, 0
      %p54 = por %p52, %p53
      %p55 = scmp.ne.s32.totalorder %s44, %s47
      %p56 = scmp.eq.s32.totalorder %s20, 9
      %p57 = por %p55, %p56
      %p58 = scmp.ne.s32.totalorder %s47, %s48
      %p59 = scmp.eq.s32.totalorder %s20, 0
      %p60 = por %p58, %p59
      %p61 = scmp.ne.s32.totalorder %s47, %s48
      %p62 = scmp.eq.s32.totalorder %s21, 9
      %p63 = por %p61, %p62
      %p65 = scmp.ne.s32.totalorder %s48, %s64
      %p66 = scmp.eq.s32.totalorder %s21, 0
      %p67 = por %p65, %p66
      %s69 = sadd.s32 %s68, 1
      %p72 = scmp.eq.s32.totalorder %s15, 9
      %p73 = scmp.ne.s32.totalorder %s68, %s70
      %p74 = scmp.eq.s32.totalorder %s15, 0
      %p75 = por %p73, %p74
      %p76 = scmp.ne.s32.totalorder %s68, %s70
      %p77 = scmp.eq.s32.totalorder %s20, 9
      %p78 = por %p76, %p77
      %p79 = scmp.ne.s32.totalorder %s70, %s71
      %p80 = scmp.eq.s32.totalorder %s20, 0
      %p81 = por %p79, %p80
      %p82 = scmp.ne.s32.totalorder %s70, %s71
      %p83 = scmp.eq.s32.totalorder %s21, 9
      %p84 = por %p82, %p83
      %p86 = scmp.ne.s32.totalorder %s71, %s85
      %p87 = scmp.eq.s32.totalorder %s21, 0
      %p88 = por %p86, %p87
      %s90 = sadd.s32 %s89, 1
      %p93 = scmp.eq.s32.totalorder %s15, 9
      %p94 = scmp.ne.s32.totalorder %s89, %s91
      %p95 = scmp.eq.s32.totalorder %s15, 0
      %p96 = por %p94, %p95
      %p97 = scmp.ne.s32.totalorder %s89, %s91
      %p98 = scmp.eq.s32.totalorder %s20, 9
      %p99 = por %p97, %p98
      %p100 = scmp.ne.s32.totalorder %s91, %s92
      %p101 = scmp.eq.s32.totalorder %s20, 0
      %p102 = por %p100, %p101
      %p103 = scmp.ne.s32.totalorder %s91, %s92
      %p104 = scmp.eq.s32.totalorder %s21, 9
      %p105 = por %p103, %p104
      %p107 = scmp.ne.s32.totalorder %s92, %s106
      %p108 = scmp.eq.s32.totalorder %s21, 0
      %p109 = por %p107, %p108
      %s111 = sadd.s32 %s110, 1
      %p114 = scmp.eq.s32.totalorder %s15, 9
      %p115 = scmp.ne.s32.totalorder %s110, %s112
      %p116 = scmp.eq.s32.totalorder %s15, 0
      %p117 = por %p115, %p116
      %p118 = scmp.ne.s32.totalorder %s110, %s112
      %p119 = scmp.eq.s32.totalorder %s20, 9
      %p120 = por %p118, %p119
      %p121 = scmp.ne.s32.totalorder %s112, %s113
      %p122 = scmp.eq.s32.totalorder %s20, 0
      %p123 = por %p121, %p122
      %p124 = scmp.ne.s32.totalorder %s112, %s113
      %p125 = scmp.eq.s32.totalorder %s21, 9
      %p126 = por %p124, %p125
      %p128 = scmp.ne.s32.totalorder %s113, %s127
      %p129 = scmp.eq.s32.totalorder %s21, 0
      %p130 = por %p128, %p129
      %s132 = sadd.s32 %s131, 1
      %p135 = scmp.eq.s32.totalorder %s15, 9
      %p136 = scmp.ne.s32.totalorder %s131, %s133
      %p137 = scmp.eq.s32.totalorder %s15, 0
      %p138 = por %p136, %p137
      %p139 = scmp.ne.s32.totalorder %s131, %s133
      %p140 = scmp.eq.s32.totalorder %s20, 9
      %p141 = por %p139, %p140
      %p142 = scmp.ne.s32.totalorder %s133, %s134
      %p143 = scmp.eq.s32.totalorder %s20, 0
      %p144 = por %p142, %p143
      %p145 = scmp.ne.s32.totalorder %s133, %s134
      %p146 = scmp.eq.s32.totalorder %s21, 9
      %p147 = por %p145, %p146
      %p149 = scmp.ne.s32.totalorder %s134, %s148
      %p150 = scmp.eq.s32.totalorder %s21, 0
      %p151 = por %p149, %p150
      %s153 = sadd.s32 %s152, 1
      %p156 = scmp.eq.s32.totalorder %s15, 9
      %p157 = scmp.ne.s32.totalorder %s152, %s154
      %p158 = scmp.eq.s32.totalorder %s15, 0
      %p159 = por %p157, %p158
      %p160 = scmp.ne.s32.totalorder %s152, %s154
      %p161 = scmp.eq.s32.totalorder %s20, 9
      %p162 = por %p160, %p161
      %p163 = scmp.ne.s32.totalorder %s154, %s155
      %p164 = scmp.eq.s32.totalorder %s20, 0
      %p165 = por %p163, %p164
      %p166 = scmp.ne.s32.totalorder %s154, %s155
      %p167 = scmp.eq.s32.totalorder %s21, 9
      %p168 = por %p166, %p167
      %p170 = scmp.ne.s32.totalorder %s155, %s169
      %p171 = scmp.eq.s32.totalorder %s21, 0
      %p172 = por %p170, %p171
      %s173 = ssub.s32 %s22, %s41
      %p174 = scmp.eq.s32.totalorder %s173, 0
      %s176 = sadd.s32 %s175, 1
      %s177 = scalar_select %p174, %s175, %s176
      %p180 = pneg %p174
      %p181 = scmp.eq.s32.totalorder %s15, 9
      %p182 = por %p180, %p181
      %p183 = scmp.ne.s32.totalorder %s175, %s178
      %p184 = scmp.eq.s32.totalorder %s15, 0
      %p185 = por %p183, %p184
      %p186 = scmp.ne.s32.totalorder %s175, %s178
      %p187 = scmp.eq.s32.totalorder %s20, 9
      %p188 = por %p186, %p187
      %p189 = scmp.ne.s32.totalorder %s178, %s179
      %p190 = scmp.eq.s32.totalorder %s20, 0
      %p191 = por %p189, %p190
      %p192 = scmp.ne.s32.totalorder %s178, %s179
      %p193 = scmp.eq.s32.totalorder %s21, 9
      %p194 = por %p192, %p193
      %p196 = scmp.ne.s32.totalorder %s179, %s195
      %p197 = scmp.eq.s32.totalorder %s21, 0
      %p198 = por %p196, %p197
      %p199 = scmp.le.s32.totalorder 1, %s15
      %p200 = scmp.lt.s32.totalorder %s15, 11
      %p201 = pnand %p199, %p200
      %p202 = pneg %p201
      // Predicated region
      $region9: #{tpu_custom_call.1} parent=5 // pred_check
        _
      $region10: #{tpu_custom_call.1} parent=5 // pred_check_branch
        %204 = sbr.rel (%p201) target = $region12
      $region11: #{tpu_custom_call.1} parent=5 // pred_region
        %s205 = ssub.s32 %s15, 1
        // Predicated region
        $region13: #{tpu_custom_call.1} parent=11 // pred_check
          %p206 = pneg %p81
        $region14: #{tpu_custom_call.1} parent=11 // pred_check_branch
          %208 = sbr.rel (%p206) target = $region16
        $region15: #{tpu_custom_call.1} parent=11 // pred_region
          _
        $region16: #{tpu_custom_call.1} parent=11 // pred_fallthru
          _
        // Predicated region
        $region17: #{tpu_custom_call.1} parent=11 // pred_check
          %p209 = pneg %p102
        $region18: #{tpu_custom_call.1} parent=11 // pred_check_branch
          %211 = sbr.rel (%p209) target = $region20
        $region19: #{tpu_custom_call.1} parent=11 // pred_region
          _
        $region20: #{tpu_custom_call.1} parent=11 // pred_fallthru
          _
        // Predicated region
        $region21: #{tpu_custom_call.1} parent=11 // pred_check
          %p212 = pneg %p123
        $region22: #{tpu_custom_call.1} parent=11 // pred_check_branch
          %214 = sbr.rel (%p212) target = $region24
        $region23: #{tpu_custom_call.1} parent=11 // pred_region
          _
        $region24: #{tpu_custom_call.1} parent=11 // pred_fallthru
          _
        // Predicated region
        $region25: #{tpu_custom_call.1} parent=11 // pred_check
          %p215 = pneg %p144
        $region26: #{tpu_custom_call.1} parent=11 // pred_check_branch
          %217 = sbr.rel (%p215) target = $region28
        $region27: #{tpu_custom_call.1} parent=11 // pred_region
          _
        $region28: #{tpu_custom_call.1} parent=11 // pred_fallthru
          _
        // Predicated region
        $region29: #{tpu_custom_call.1} parent=11 // pred_check
          %p218 = pneg %p165
        $region30: #{tpu_custom_call.1} parent=11 // pred_check_branch
          %220 = sbr.rel (%p218) target = $region32
        $region31: #{tpu_custom_call.1} parent=11 // pred_region
          _
        $region32: #{tpu_custom_call.1} parent=11 // pred_fallthru
          _
      $region12: #{tpu_custom_call.1} parent=5 // pred_fallthru
        _
      %p221 = scmp.lt.s32.totalorder %s15, 10
      // Predicated region
      $region33: #{tpu_custom_call.1} parent=5 // pred_check
        %p222 = pneg %p221
      $region34: #{tpu_custom_call.1} parent=5 // pred_check_branch
        %224 = sbr.rel (%p222) target = $region36
      $region35: #{tpu_custom_call.1} parent=5 // pred_region
        // Predicated region
        $region37: #{tpu_custom_call.1} parent=35 // pred_check
          %p225 = pneg %p54
        $region38: #{tpu_custom_call.1} parent=35 // pred_check_branch
          %227 = sbr.rel (%p225) target = $region40
        $region39: #{tpu_custom_call.1} parent=35 // pred_region
          %p228 = scmp.lt.s32.totalorder %s22, 1
          %s229 = scalar_select %p228, %s22, 1
          %s230 = smul.addr %s229, 8
          %s231 = scalar_lea.vmem %s0, %s230
        $region40: #{tpu_custom_call.1} parent=35 // pred_fallthru
          _
      $region36: #{tpu_custom_call.1} parent=5 // pred_fallthru
        _
      %p232 = scmp.le.s32.totalorder 1, %s15
      %p233 = scmp.lt.s32.totalorder %s15, 11
      %p234 = pnand %p232, %p233
      %p235 = pneg %p234
      // Predicated region
      $region41: #{tpu_custom_call.1} parent=5 // pred_check
        _
      $region42: #{tpu_custom_call.1} parent=5 // pred_check_branch
        %237 = sbr.rel (%p234) target = $region44
      $region43: #{tpu_custom_call.1} parent=5 // pred_region
        %s238 = ssub.s32 %s15, 1
        %p239 = scmp.lt.s32.totalorder %s25, 1
        %s240 = scalar_select %p239, %s25, 1
        %s241 = smul.addr %s240, 8
        %s242 = scalar_lea.vmem %s0, %s241
        %p243 = pneg %p60
        %p244 = pneg %p57
        %p245 = pneg %p81
        %p246 = pneg %p78
        %p247 = pneg %p102
        %p248 = pneg %p99
        %p249 = pneg %p123
        %p250 = pneg %p120
        %p251 = pneg %p144
        %p252 = pneg %p141
        %p253 = pneg %p165
        %p254 = pneg %p162
        %p255 = pneg %p191
        %p256 = pneg %p188
        %s257 = sand.u32 %s178, 1
        %s258 = scalar_lea.sflag [#allocation6], %s257
        %s259 = sand.u32 %s178, 1
        %s260 = smul.addr %s259, 8
        %s261 = scalar_lea.vmem [#allocation5], %s260
        %p262 = scmp.lt.s32.totalorder %s25, 1
        %s263 = scalar_select %p262, %s25, 1
        %s264 = smul.addr %s263, 8
        %s265 = scalar_lea.vmem %s0, %s264
        %p266 = scmp.eq.s32.totalorder %s26, 0
        %p267 = scmp.eq.s32.totalorder %s27, 0
        %p268 = pnand %p266, %p267
        %p269 = pneg %p268
        // Predicated region
        $region45: #{tpu_custom_call.1} parent=43 // pred_check
          _
        $region46: #{tpu_custom_call.1} parent=43 // pred_check_branch
          %271 = sbr.rel (%p268) target = $region48
        $region47: #{tpu_custom_call.1} parent=43 // pred_region
          %272 = vst [vmem:[#allocation4] sm:$0xff] 0.0
        $region48: #{tpu_custom_call.1} parent=43 // pred_fallthru
          _
        %v273 = vld [vmem:[%s265] sm:$0xff]
        // Predicated region
        $region49: #{tpu_custom_call.1} parent=43 // pred_check
          %p274 = pneg %p267
        $region50: #{tpu_custom_call.1} parent=43 // pred_check_branch
          %276 = sbr.rel (%p274) target = $region52
        $region51: #{tpu_custom_call.1} parent=43 // pred_region
          %s277 = smul.u32 %s26, 40
          %s278 = scalar_lea.vmem %s2, %s277
          %v279 = vld [vmem:[%s278] sm:$0xff]
          %v280 = vld [vmem:[%s278 + $0x8] sm:$0xff]
          %v281 = vld [vmem:[%s278 + $0x10] sm:$0xff]
          %v282 = vld [vmem:[%s278 + $0x18] sm:$0xff]
          %v283 = vld [vmem:[%s278 + $0x20] sm:$0xff]
          %vm284 = vcmask 326656
          %v286 = vsel %vm284, %v273, 0
          %288 = vmatprep.subr.mxu0 0.0
          %289 = vmatpush1.msra.mxu0 %v279
          %290 = vmatprep.subr.mxu0 0.0
          %291 = vmatpush1.msra.mxu0 %v280
          %292 = vmatprep.subr.mxu0 0.0
          %293 = vmatpush1.msra.mxu0 %v281
          %294 = vmatprep.subr.mxu0 0.0
          %295 = vmatpush1.msra.mxu0 %v282
          %296 = vmatprep.subr.mxu0 0.0
          %297 = vmatpush1.msra.mxu0 %v283
          %298 = vmatprep.subr.mxu0 0.0
          %299 = vmatpush1.msra.mxu0 0.0
          %300 = vmatprep.subr.mxu0 0.0
          %301 = vmatpush1.msra.mxu0 0.0
          %302 = vmatprep.subr.mxu0 0.0
          %303 = vmatpush1.msra.mxu0 0.0
          %304 = vmatprep.subr.mxu0 0.0
          %305 = vmatpush1.msra.mxu0 0.0
          %306 = vmatprep.subr.mxu0 0.0
          %307 = vmatpush1.msra.mxu0 0.0
          %308 = vmatprep.subr.mxu0 0.0
          %309 = vmatpush1.msra.mxu0 0.0
          %310 = vmatprep.subr.mxu0 0.0
          %311 = vmatpush1.msra.mxu0 0.0
          %312 = vmatprep.subr.mxu0 0.0
          %313 = vmatpush1.msra.mxu0 0.0
          %314 = vmatprep.subr.mxu0 0.0
          %315 = vmatpush1.msra.mxu0 0.0
          %316 = vmatprep.subr.mxu0 0.0
          %317 = vmatpush1.msra.mxu0 0.0
          %318 = vmatprep.subr.mxu0 0.0
          %319 = vmatpush1.msra.mxu0 0.0
          %320 = vmatprep.subr.mxu0 0.0
          %321 = vmatpush1.msra.mxu0 0.0
          %322 = vmatprep.subr.mxu0 0.0
          %323 = vmatpush1.msra.mxu0 0.0
          %324 = vmatprep.subr.mxu0 0.0
          %325 = vmatpush1.msra.mxu0 0.0
          %326 = vmatprep.subr.mxu0 0.0
          %327 = vmatpush1.msra.mxu0 0.0
          %328 = vmatprep.subr.mxu0 0.0
          %329 = vmatpush1.msra.mxu0 0.0
          %330 = vmatprep.subr.mxu0 0.0
          %331 = vmatpush1.msra.mxu0 0.0
          %332 = vmatprep.subr.mxu0 0.0
          %333 = vmatpush1.msra.mxu0 0.0
          %334 = vmatprep.subr.mxu0 0.0
          %335 = vmatpush1.msra.mxu0 0.0
          %336 = vmatprep.subr.mxu0 0.0
          %337 = vmatpush1.msra.mxu0 0.0
          %338 = vmatprep.subr.mxu0 0.0
          %339 = vmatpush1.msra.mxu0 0.0
          %340 = vmatprep.subr.mxu0 0.0
          %341 = vmatpush1.msra.mxu0 0.0
          %342 = vmatprep.subr.mxu0 0.0
          %343 = vmatpush1.msra.mxu0 0.0
          %344 = vmatprep.subr.mxu0 0.0
          %345 = vmatpush1.msra.mxu0 0.0
          %346 = vmatprep.subr.mxu0 0.0
          %347 = vmatpush1.msra.mxu0 0.0
          %348 = vmatprep.subr.mxu0 0.0
          %349 = vmatpush1.msra.mxu0 0.0
          %350 = vmatprep.subr.mxu0 0.0
          %351 = vmatpush1.msra.mxu0 0.0
          %352 = vmatprep.mubr.f32.mxu0 0.0
          %353 = vmatmul.mubr.f32.gmra.mrb[0].mxu0 %v286
          %v354 = vpop.f32.mrb[0].mxu0
          %v355 = vadd.f32 0.0, %v354
          %v356 = vpop.f32.mrb[0].mxu0
          %357 = vdwg.mxu0
          %s358 = scalar_lea.vmem %s3, %s277
          %v359 = vld [vmem:[%s358] sm:$0xff]
          %v360 = vld [vmem:[%s358 + $0x8] sm:$0xff]
          %v361 = vld [vmem:[%s358 + $0x10] sm:$0xff]
          %v362 = vld [vmem:[%s358 + $0x18] sm:$0xff]
          %v363 = vld [vmem:[%s358 + $0x20] sm:$0xff]
          %364 = vmatprep.subr.mxu0 0.0
          %365 = vmatpush1.msra.mxu0 %v359
          %366 = vmatprep.subr.mxu0 0.0
          %367 = vmatpush1.msra.mxu0 %v360
          %368 = vmatprep.subr.mxu0 0.0
          %369 = vmatpush1.msra.mxu0 %v361
          %370 = vmatprep.subr.mxu0 0.0
          %371 = vmatpush1.msra.mxu0 %v362
          %372 = vmatprep.subr.mxu0 0.0
          %373 = vmatpush1.msra.mxu0 %v363
          %374 = vmatprep.subr.mxu0 0.0
          %375 = vmatpush1.msra.mxu0 0.0
          %376 = vmatprep.subr.mxu0 0.0
          %377 = vmatpush1.msra.mxu0 0.0
          %378 = vmatprep.subr.mxu0 0.0
          %379 = vmatpush1.msra.mxu0 0.0
          %380 = vmatprep.subr.mxu0 0.0
          %381 = vmatpush1.msra.mxu0 0.0
          %382 = vmatprep.subr.mxu0 0.0
          %383 = vmatpush1.msra.mxu0 0.0
          %384 = vmatprep.subr.mxu0 0.0
          %385 = vmatpush1.msra.mxu0 0.0
          %386 = vmatprep.subr.mxu0 0.0
          %387 = vmatpush1.msra.mxu0 0.0
          %388 = vmatprep.subr.mxu0 0.0
          %389 = vmatpush1.msra.mxu0 0.0
          %390 = vmatprep.subr.mxu0 0.0
          %391 = vmatpush1.msra.mxu0 0.0
          %392 = vmatprep.subr.mxu0 0.0
          %393 = vmatpush1.msra.mxu0 0.0
          %394 = vmatprep.subr.mxu0 0.0
          %395 = vmatpush1.msra.mxu0 0.0
          %396 = vmatprep.subr.mxu0 0.0
          %397 = vmatpush1.msra.mxu0 0.0
          %398 = vmatprep.subr.mxu0 0.0
          %399 = vmatpush1.msra.mxu0 0.0
          %400 = vmatprep.subr.mxu0 0.0
          %401 = vmatpush1.msra.mxu0 0.0
          %402 = vmatprep.subr.mxu0 0.0
          %403 = vmatpush1.msra.mxu0 0.0
          %404 = vmatprep.subr.mxu0 0.0
          %405 = vmatpush1.msra.mxu0 0.0
          %406 = vmatprep.subr.mxu0 0.0
          %407 = vmatpush1.msra.mxu0 0.0
          %408 = vmatprep.subr.mxu0 0.0
          %409 = vmatpush1.msra.mxu0 0.0
          %410 = vmatprep.subr.mxu0 0.0
          %411 = vmatpush1.msra.mxu0 0.0
          %412 = vmatprep.subr.mxu0 0.0
          %413 = vmatpush1.msra.mxu0 0.0
          %414 = vmatprep.subr.mxu0 0.0
          %415 = vmatpush1.msra.mxu0 0.0
          %416 = vmatprep.subr.mxu0 0.0
          %417 = vmatpush1.msra.mxu0 0.0
          %418 = vmatprep.subr.mxu0 0.0
          %419 = vmatpush1.msra.mxu0 0.0
          %420 = vmatprep.subr.mxu0 0.0
          %421 = vmatpush1.msra.mxu0 0.0
          %422 = vmatprep.subr.mxu0 0.0
          %423 = vmatpush1.msra.mxu0 0.0
          %424 = vmatprep.subr.mxu0 0.0
          %425 = vmatpush1.msra.mxu0 0.0
          %426 = vmatprep.subr.mxu0 0.0
          %427 = vmatpush1.msra.mxu0 0.0
          %428 = vmatprep.mubr.f32.mxu0 0.0
          %429 = vmatmul.mubr.f32.gmra.mrb[0].mxu0 %v286
          %v430 = vpop.f32.mrb[0].mxu0
          %v431 = vadd.f32 0.0, %v430
          %v432 = vpop.f32.mrb[0].mxu0
          %433 = vdwg.mxu0
          %vm434 = vcmask 64512
          %435 = vst.msk [vmem:[#allocation2] sm:$0xff] %vm434, %v355
          %436 = vst.msk [vmem:[#allocation3] sm:$0xff] %vm434, %v431
        $region52: #{tpu_custom_call.1} parent=43 // pred_fallthru
          _
        %s437 = smul.u32 %s27, 8
        %s438 = scalar_lea.vmem %s265, %s437
        %v439 = vld [vmem:[%s438] sm:$0xff]
        %s440 = smul.u32 %s26, 40
        %s441 = scalar_lea.vmem %s1, %s440
        %v442 = vld [vmem:[%s441] sm:$0xff]
        %v443 = vld [vmem:[%s441 + $0x8] sm:$0xff]
        %v444 = vld [vmem:[%s441 + $0x10] sm:$0xff]
        %v445 = vld [vmem:[%s441 + $0x18] sm:$0xff]
        %v446 = vld [vmem:[%s441 + $0x20] sm:$0xff]
        %vm447 = vcmask 326656
        %v449 = vsel %vm447, %v439, 0
        %451 = vmatprep.subr.mxu0 0.0
        %452 = vmatpush1.msra.mxu0 %v442
        %453 = vmatprep.subr.mxu0 0.0
        %454 = vmatpush1.msra.mxu0 %v443
        %455 = vmatprep.subr.mxu0 0.0
        %456 = vmatpush1.msra.mxu0 %v444
        %457 = vmatprep.subr.mxu0 0.0
        %458 = vmatpush1.msra.mxu0 %v445
        %459 = vmatprep.subr.mxu0 0.0
        %460 = vmatpush1.msra.mxu0 %v446
        %461 = vmatprep.subr.mxu0 0.0
        %462 = vmatpush1.msra.mxu0 0.0
        %463 = vmatprep.subr.mxu0 0.0
        %464 = vmatpush1.msra.mxu0 0.0
        %465 = vmatprep.subr.mxu0 0.0
        %466 = vmatpush1.msra.mxu0 0.0
        %467 = vmatprep.subr.mxu0 0.0
        %468 = vmatpush1.msra.mxu0 0.0
        %469 = vmatprep.subr.mxu0 0.0
        %470 = vmatpush1.msra.mxu0 0.0
        %471 = vmatprep.subr.mxu0 0.0
        %472 = vmatpush1.msra.mxu0 0.0
        %473 = vmatprep.subr.mxu0 0.0
        %474 = vmatpush1.msra.mxu0 0.0
        %475 = vmatprep.subr.mxu0 0.0
        %476 = vmatpush1.msra.mxu0 0.0
        %477 = vmatprep.subr.mxu0 0.0
        %478 = vmatpush1.msra.mxu0 0.0
        %479 = vmatprep.subr.mxu0 0.0
        %480 = vmatpush1.msra.mxu0 0.0
        %481 = vmatprep.subr.mxu0 0.0
        %482 = vmatpush1.msra.mxu0 0.0
        %483 = vmatprep.subr.mxu0 0.0
        %484 = vmatpush1.msra.mxu0 0.0
        %485 = vmatprep.subr.mxu0 0.0
        %486 = vmatpush1.msra.mxu0 0.0
        %487 = vmatprep.subr.mxu0 0.0
        %488 = vmatpush1.msra.mxu0 0.0
        %489 = vmatprep.subr.mxu0 0.0
        %490 = vmatpush1.msra.mxu0 0.0
        %491 = vmatprep.subr.mxu0 0.0
        %492 = vmatpush1.msra.mxu0 0.0
        %493 = vmatprep.subr.mxu0 0.0
        %494 = vmatpush1.msra.mxu0 0.0
        %495 = vmatprep.subr.mxu0 0.0
        %496 = vmatpush1.msra.mxu0 0.0
        %497 = vmatprep.subr.mxu0 0.0
        %498 = vmatpush1.msra.mxu0 0.0
        %499 = vmatprep.subr.mxu0 0.0
        %500 = vmatpush1.msra.mxu0 0.0
        %501 = vmatprep.subr.mxu0 0.0
        %502 = vmatpush1.msra.mxu0 0.0
        %503 = vmatprep.subr.mxu0 0.0
        %504 = vmatpush1.msra.mxu0 0.0
        %505 = vmatprep.subr.mxu0 0.0
        %506 = vmatpush1.msra.mxu0 0.0
        %507 = vmatprep.subr.mxu0 0.0
        %508 = vmatpush1.msra.mxu0 0.0
        %509 = vmatprep.subr.mxu0 0.0
        %510 = vmatpush1.msra.mxu0 0.0
        %511 = vmatprep.subr.mxu0 0.0
        %512 = vmatpush1.msra.mxu0 0.0
        %513 = vmatprep.subr.mxu0 0.0
        %514 = vmatpush1.msra.mxu0 0.0
        %515 = vmatprep.mubr.f32.mxu0 0.0
        %516 = vmatmul.mubr.f32.gmra.mrb[0].mxu0 %v449
        %v517 = vpop.f32.mrb[0].mxu0
        %v518 = vadd.f32 0.0, %v517
        %v519 = vpop.f32.mrb[0].mxu0
        %520 = vdwg.mxu0
        %v521 = vld [vmem:[#allocation2] sm:$0xff]
        %vm522 = vcmask 64512
        %v524 = vsel %vm522, %v518, 0
        %v527 = vsel %vm522, %v521, 0
        %529 = vmatprep.subr.mxu0 0.0
        %530 = vmatpush1.xpose.msra.mxu0 %v527
        %531 = vmatprep.subr.mxu0 0.0
        %532 = vmatpush1.xpose.msra.mxu0 0.0
        %533 = vmatprep.subr.mxu0 0.0
        %534 = vmatpush1.xpose.msra.mxu0 0.0
        %535 = vmatprep.subr.mxu0 0.0
        %536 = vmatpush1.xpose.msra.mxu0 0.0
        %537 = vmatprep.subr.mxu0 0.0
        %538 = vmatpush1.xpose.msra.mxu0 0.0
        %539 = vmatprep.subr.mxu0 0.0
        %540 = vmatpush1.xpose.msra.mxu0 0.0
        %541 = vmatprep.subr.mxu0 0.0
        %542 = vmatpush1.xpose.msra.mxu0 0.0
        %543 = vmatprep.subr.mxu0 0.0
        %544 = vmatpush1.xpose.msra.mxu0 0.0
        %545 = vmatprep.subr.mxu0 0.0
        %546 = vmatpush1.xpose.msra.mxu0 0.0
        %547 = vmatprep.subr.mxu0 0.0
        %548 = vmatpush1.xpose.msra.mxu0 0.0
        %549 = vmatprep.subr.mxu0 0.0
        %550 = vmatpush1.xpose.msra.mxu0 0.0
        %551 = vmatprep.subr.mxu0 0.0
        %552 = vmatpush1.xpose.msra.mxu0 0.0
        %553 = vmatprep.subr.mxu0 0.0
        %554 = vmatpush1.xpose.msra.mxu0 0.0
        %555 = vmatprep.subr.mxu0 0.0
        %556 = vmatpush1.xpose.msra.mxu0 0.0
        %557 = vmatprep.subr.mxu0 0.0
        %558 = vmatpush1.xpose.msra.mxu0 0.0
        %559 = vmatprep.subr.mxu0 0.0
        %560 = vmatpush1.xpose.msra.mxu0 0.0
        %561 = vmatprep.subr.mxu0 0.0
        %562 = vmatpush1.xpose.msra.mxu0 0.0
        %563 = vmatprep.subr.mxu0 0.0
        %564 = vmatpush1.xpose.msra.mxu0 0.0
        %565 = vmatprep.subr.mxu0 0.0
        %566 = vmatpush1.xpose.msra.mxu0 0.0
        %567 = vmatprep.subr.mxu0 0.0
        %568 = vmatpush1.xpose.msra.mxu0 0.0
        %569 = vmatprep.subr.mxu0 0.0
        %570 = vmatpush1.xpose.msra.mxu0 0.0
        %571 = vmatprep.subr.mxu0 0.0
        %572 = vmatpush1.xpose.msra.mxu0 0.0
        %573 = vmatprep.subr.mxu0 0.0
        %574 = vmatpush1.xpose.msra.mxu0 0.0
        %575 = vmatprep.subr.mxu0 0.0
        %576 = vmatpush1.xpose.msra.mxu0 0.0
        %577 = vmatprep.subr.mxu0 0.0
        %578 = vmatpush1.xpose.msra.mxu0 0.0
        %579 = vmatprep.subr.mxu0 0.0
        %580 = vmatpush1.xpose.msra.mxu0 0.0
        %581 = vmatprep.subr.mxu0 0.0
        %582 = vmatpush1.xpose.msra.mxu0 0.0
        %583 = vmatprep.subr.mxu0 0.0
        %584 = vmatpush1.xpose.msra.mxu0 0.0
        %585 = vmatprep.subr.mxu0 0.0
        %586 = vmatpush1.xpose.msra.mxu0 0.0
        %587 = vmatprep.subr.mxu0 0.0
        %588 = vmatpush1.xpose.msra.mxu0 0.0
        %589 = vmatprep.subr.mxu0 0.0
        %590 = vmatpush1.xpose.msra.mxu0 0.0
        %591 = vmatprep.subr.mxu0 0.0
        %592 = vmatpush1.xpose.msra.mxu0 0.0
        %593 = vmatprep.mubr.f32.mxu0 0.0
        %594 = vmatmul.mubr.f32.gmra.mrb[0].mxu0 %v524
        %v595 = vpop.f32.mrb[0].mxu0
        %v596 = vadd.f32 0.0, %v595
        %v597 = vpop.f32.mrb[0].mxu0
        %598 = vdwg.mxu0
        %v599 = vsel %vm522, %v596, -inf
        %600 = vmax.xlane.f32.xlu0 %v599
        %v601 = vpop.xlane.xlu0 %600
        %v602 = vsub.f32 %v596, %v601
        %v603 = vmul.f32 %v602, 1.442695
        %v604 = vpow.pop %v603
        %v605 = vsel %vm522, %v604, 0.0
        %606 = vadd.xlane.f32.xlu0 %v605
        %v607 = vpop.xlane.xlu0 %606
        %v608 = vrcp.pop %v607
        %v609 = vld [vmem:[#allocation3] sm:$0xff]
        %v611 = vsel %vm522, %v604, 0
        %613 = vmatprep.subr.mxu0 0.0
        %614 = vmatpush1.msra.mxu0 %v609
        %615 = vmatprep.subr.mxu0 0.0
        %616 = vmatpush1.msra.mxu0 0.0
        %617 = vmatprep.subr.mxu0 0.0
        %618 = vmatpush1.msra.mxu0 0.0
        %619 = vmatprep.subr.mxu0 0.0
        %620 = vmatpush1.msra.mxu0 0.0
        %621 = vmatprep.subr.mxu0 0.0
        %622 = vmatpush1.msra.mxu0 0.0
        %623 = vmatprep.subr.mxu0 0.0
        %624 = vmatpush1.msra.mxu0 0.0
        %625 = vmatprep.subr.mxu0 0.0
        %626 = vmatpush1.msra.mxu0 0.0
        %627 = vmatprep.subr.mxu0 0.0
        %628 = vmatpush1.msra.mxu0 0.0
        %629 = vmatprep.subr.mxu0 0.0
        %630 = vmatpush1.msra.mxu0 0.0
        %631 = vmatprep.subr.mxu0 0.0
        %632 = vmatpush1.msra.mxu0 0.0
        %633 = vmatprep.subr.mxu0 0.0
        %634 = vmatpush1.msra.mxu0 0.0
        %635 = vmatprep.subr.mxu0 0.0
        %636 = vmatpush1.msra.mxu0 0.0
        %637 = vmatprep.subr.mxu0 0.0
        %638 = vmatpush1.msra.mxu0 0.0
        %639 = vmatprep.subr.mxu0 0.0
        %640 = vmatpush1.msra.mxu0 0.0
        %641 = vmatprep.subr.mxu0 0.0
        %642 = vmatpush1.msra.mxu0 0.0
        %643 = vmatprep.subr.mxu0 0.0
        %644 = vmatpush1.msra.mxu0 0.0
        %645 = vmatprep.subr.mxu0 0.0
        %646 = vmatpush1.msra.mxu0 0.0
        %647 = vmatprep.subr.mxu0 0.0
        %648 = vmatpush1.msra.mxu0 0.0
        %649 = vmatprep.subr.mxu0 0.0
        %650 = vmatpush1.msra.mxu0 0.0
        %651 = vmatprep.subr.mxu0 0.0
        %652 = vmatpush1.msra.mxu0 0.0
        %653 = vmatprep.subr.mxu0 0.0
        %654 = vmatpush1.msra.mxu0 0.0
        %655 = vmatprep.subr.mxu0 0.0
        %656 = vmatpush1.msra.mxu0 0.0
        %657 = vmatprep.subr.mxu0 0.0
        %658 = vmatpush1.msra.mxu0 0.0
        %659 = vmatprep.subr.mxu0 0.0
        %660 = vmatpush1.msra.mxu0 0.0
        %661 = vmatprep.subr.mxu0 0.0
        %662 = vmatpush1.msra.mxu0 0.0
        %663 = vmatprep.subr.mxu0 0.0
        %664 = vmatpush1.msra.mxu0 0.0
        %665 = vmatprep.subr.mxu0 0.0
        %666 = vmatpush1.msra.mxu0 0.0
        %667 = vmatprep.subr.mxu0 0.0
        %668 = vmatpush1.msra.mxu0 0.0
        %669 = vmatprep.subr.mxu0 0.0
        %670 = vmatpush1.msra.mxu0 0.0
        %671 = vmatprep.subr.mxu0 0.0
        %672 = vmatpush1.msra.mxu0 0.0
        %673 = vmatprep.subr.mxu0 0.0
        %674 = vmatpush1.msra.mxu0 0.0
        %675 = vmatprep.subr.mxu0 0.0
        %676 = vmatpush1.msra.mxu0 0.0
        %677 = vmatprep.mubr.f32.mxu0 0.0
        %678 = vmatmul.mubr.f32.gmra.mrb[0].mxu0 %v611
        %v679 = vpop.f32.mrb[0].mxu0
        %v680 = vadd.f32 0.0, %v679
        %v681 = vpop.f32.mrb[0].mxu0
        %682 = vdwg.mxu0
        %v683 = vmul.f32 %v680, %v608
        %s684 = scalar_lea.vmem [#allocation4], %s437
        %v685 = vld [vmem:[%s684] sm:$0xff]
        %s686 = smul.u32 %s26, 8
        %s687 = scalar_lea.vmem %s4, %s686
        %v688 = vld [vmem:[%s687] sm:$0xff]
        %v690 = vsel %vm522, %v683, 0
        %692 = vmatprep.subr.mxu0 0.0
        %693 = vmatpush1.msra.mxu0 %v688
        %694 = vmatprep.subr.mxu0 0.0
        %695 = vmatpush1.msra.mxu0 0.0
        %696 = vmatprep.subr.mxu0 0.0
        %697 = vmatpush1.msra.mxu0 0.0
        %698 = vmatprep.subr.mxu0 0.0
        %699 = vmatpush1.msra.mxu0 0.0
        %700 = vmatprep.subr.mxu0 0.0
        %701 = vmatpush1.msra.mxu0 0.0
        %702 = vmatprep.subr.mxu0 0.0
        %703 = vmatpush1.msra.mxu0 0.0
        %704 = vmatprep.subr.mxu0 0.0
        %705 = vmatpush1.msra.mxu0 0.0
        %706 = vmatprep.subr.mxu0 0.0
        %707 = vmatpush1.msra.mxu0 0.0
        %708 = vmatprep.subr.mxu0 0.0
        %709 = vmatpush1.msra.mxu0 0.0
        %710 = vmatprep.subr.mxu0 0.0
        %711 = vmatpush1.msra.mxu0 0.0
        %712 = vmatprep.subr.mxu0 0.0
        %713 = vmatpush1.msra.mxu0 0.0
        %714 = vmatprep.subr.mxu0 0.0
        %715 = vmatpush1.msra.mxu0 0.0
        %716 = vmatprep.subr.mxu0 0.0
        %717 = vmatpush1.msra.mxu0 0.0
        %718 = vmatprep.subr.mxu0 0.0
        %719 = vmatpush1.msra.mxu0 0.0
        %720 = vmatprep.subr.mxu0 0.0
        %721 = vmatpush1.msra.mxu0 0.0
        %722 = vmatprep.subr.mxu0 0.0
        %723 = vmatpush1.msra.mxu0 0.0
        %724 = vmatprep.subr.mxu0 0.0
        %725 = vmatpush1.msra.mxu0 0.0
        %726 = vmatprep.subr.mxu0 0.0
        %727 = vmatpush1.msra.mxu0 0.0
        %728 = vmatprep.subr.mxu0 0.0
        %729 = vmatpush1.msra.mxu0 0.0
        %730 = vmatprep.subr.mxu0 0.0
        %731 = vmatpush1.msra.mxu0 0.0
        %732 = vmatprep.subr.mxu0 0.0
        %733 = vmatpush1.msra.mxu0 0.0
        %734 = vmatprep.subr.mxu0 0.0
        %735 = vmatpush1.msra.mxu0 0.0
        %736 = vmatprep.subr.mxu0 0.0
        %737 = vmatpush1.msra.mxu0 0.0
        %738 = vmatprep.subr.mxu0 0.0
        %739 = vmatpush1.msra.mxu0 0.0
        %740 = vmatprep.subr.mxu0 0.0
        %741 = vmatpush1.msra.mxu0 0.0
        %742 = vmatprep.subr.mxu0 0.0
        %743 = vmatpush1.msra.mxu0 0.0
        %744 = vmatprep.subr.mxu0 0.0
        %745 = vmatpush1.msra.mxu0 0.0
        %746 = vmatprep.subr.mxu0 0.0
        %747 = vmatpush1.msra.mxu0 0.0
        %748 = vmatprep.subr.mxu0 0.0
        %749 = vmatpush1.msra.mxu0 0.0
        %750 = vmatprep.subr.mxu0 0.0
        %751 = vmatpush1.msra.mxu0 0.0
        %752 = vmatprep.subr.mxu0 0.0
        %753 = vmatpush1.msra.mxu0 0.0
        %754 = vmatprep.subr.mxu0 0.0
        %755 = vmatpush1.msra.mxu0 0.0
        %756 = vmatprep.mubr.f32.mxu0 0.0
        %757 = vmatmul.mubr.f32.gmra.mrb[0].mxu0 %v690
        %v758 = vpop.f32.mrb[0].mxu0
        %v759 = vadd.f32 0.0, %v758
        %v760 = vpop.f32.mrb[0].mxu0
        %761 = vdwg.mxu0
        %v762 = vadd.f32 %v685, %v759
        %763 = vst [vmem:[%s684] sm:$0xff] %v762
        %p764 = scmp.eq.s32.totalorder %s26, 4
        // Predicated region
        $region53: #{tpu_custom_call.1} parent=43 // pred_check
          %p765 = pneg %p764
        $region54: #{tpu_custom_call.1} parent=43 // pred_check_branch
          %767 = sbr.rel (%p765) target = $region56
        $region55: #{tpu_custom_call.1} parent=43 // pred_region
          %v768 = vld [vmem:[%s684] sm:$0xff]
          %v769 = vld [vmem:[%s5] sm:$0x1]
          %v771 = vlaneseq
          %v772 = vshrl.u32 %v771, 7
          %v773 = vsub.s32 0, %v772
          %v774 = vrot.slane %v769, %v773
          %v776 = vadd.f32 %v768, %v774
          %s777 = scalar_lea.vmem %s261, %s437 [#allocation5]
          %778 = vst [vmem:[%s777] sm:$0xff] %v776
        $region56: #{tpu_custom_call.1} parent=43 // pred_fallthru
          _
        %s779 = sand.u32 %s178, 1
        %s780 = scalar_lea.sflag [#allocation6], %s779
        %s781 = sand.u32 %s178, 1
        %s782 = smul.addr %s781, 8
        %s783 = scalar_lea.vmem [#allocation5], %s782
        // Predicated region
        $region57: #{tpu_custom_call.1} parent=43 // pred_check
          %p784 = pneg %p188
        $region58: #{tpu_custom_call.1} parent=43 // pred_check_branch
          %786 = sbr.rel (%p784) target = $region60
        $region59: #{tpu_custom_call.1} parent=43 // pred_region
          %s788 = ssub.s32 128, 128
          %789 = vsyncadd %s780, %s788
          %s790 = smul.addr %s25, 128
          %s791 = scalar_lea.hbm %s6, %s790
          %s793 = sshll.u32 %s783, 4
          %s794 = int_to_ptr.vmem [resolvable:$true] %s793
          %796 = dma.vmem_to_hbm [thread:$0]  %s794, 128, %s791, %s780
        $region60: #{tpu_custom_call.1} parent=43 // pred_fallthru
          _
      $region44: #{tpu_custom_call.1} parent=5 // pred_fallthru
        _
      %p797 = scmp.le.s32.totalorder 2, %s15
      // Predicated region
      $region61: #{tpu_custom_call.1} parent=5 // pred_check
        %p798 = pneg %p797
      $region62: #{tpu_custom_call.1} parent=5 // pred_check_branch
        %800 = sbr.rel (%p798) target = $region64
      $region63: #{tpu_custom_call.1} parent=5 // pred_region
        %s801 = ssub.s32 %s15, 2
        // Predicated region
        $region65: #{tpu_custom_call.1} parent=63 // pred_check
          %p802 = pneg %p194
        $region66: #{tpu_custom_call.1} parent=63 // pred_check_branch
          %804 = sbr.rel (%p802) target = $region68
        $region67: #{tpu_custom_call.1} parent=63 // pred_region
          %s805 = sand.u32 %s179, 1
          %s806 = scalar_lea.sflag [#allocation6], %s805
          %s807 = sand.u32 %s179, 1
          %s808 = smul.addr %s807, 8
          %s809 = scalar_lea.vmem [#allocation5], %s808
          %810 = dma.done %s806, 128
        $region68: #{tpu_custom_call.1} parent=63 // pred_fallthru
          _
      $region64: #{tpu_custom_call.1} parent=5 // pred_fallthru
        _
    $region6: #{tpu_custom_call.1} parent=1 // loop_footer
      %s19 = sadd.s32 1, %s15
    $region7: #{tpu_custom_call.1} parent=1 // loop_footer_branch
      %14 = sbr.rel target = $region3
    $region8: #{tpu_custom_call.1} parent=1 // loop_exit
      _
    %811 = vsyncpa [#allocation6], 1
    %s812 = scalar_lea.sflag [#allocation6], 1
    %813 = vsyncpa %s812, 1

</llo_original>
